<compile_context>
chip_gen: v7x
topology: tpu7x:2x2x1
jax: 0.10.0
libtpu: 0.0.40
codegen_flags: <defaults>
</compile_context>

<pallas_src>
import jax
import jax.numpy as jnp
from jax.experimental import pallas as pl
from jax.experimental.pallas import tpu as pltpu


def _self_attention_kernel(
    x_ref,      # (BB*S, E)  input rows for this batch-block
    wqkv_ref,   # (E, 3E)    fused [Wq | Wk | Wv], (in, out) layout
    bqkv_ref,   # (1, 3E)    fused [bq | bk | bv]
    wo_ref,     # (E, E)     output projection, (in, out) layout
    bo_ref,     # (1, E)
    out_ref,    # (BB*S, E)
    attn_ref,   # (BB, S, S)
):
    bb, s, _ = attn_ref.shape
    e = x_ref.shape[-1]

    x = x_ref[...]                                                    # (BB*S, E) f32

    # ---- Fused Q/K/V projection: one MXU matmul with N = 3E. ----
    qkv = jnp.dot(x, wqkv_ref[...], preferred_element_type=jnp.float32) + bqkv_ref[...]

    q = qkv[:, 0 * e:1 * e].reshape(bb, s, e)
    k = qkv[:, 1 * e:2 * e].reshape(bb, s, e)
    v = qkv[:, 2 * e:3 * e].reshape(bb, s, e)

    # ---- Scaled dot-product attention scores (no K transpose materialized). ----
    scale = 1.0 / jnp.sqrt(jnp.float32(e))
    scores = jax.lax.dot_general(
        q, k,
        dimension_numbers=(((2,), (2,)), ((0,), (0,))),               # contract lane dims
        preferred_element_type=jnp.float32,
    ) * scale                                                         # (BB, S, S)

    # ---- Numerically stable softmax; reciprocal goes to the (idle) EUP slot. ----
    m = jnp.max(scores, axis=-1, keepdims=True)
    p = jnp.exp(scores - m)
    denom = jnp.sum(p, axis=-1, keepdims=True)
    attn = p * pl.reciprocal(denom, approx=True)                      # (BB, S, S)

    # ---- Attention-weighted values, then output projection over all rows. ----
    ctx = jax.lax.dot_general(
        attn, v,
        dimension_numbers=(((2,), (1,)), ((0,), (0,))),
        preferred_element_type=jnp.float32,
    )                                                                 # (BB, S, E)

    out = jnp.dot(ctx.reshape(bb * s, e), wo_ref[...],
                  preferred_element_type=jnp.float32) + bo_ref[...]   # (BB*S, E)

    out_ref[...] = out.astype(out_ref.dtype)
    attn_ref[...] = attn.astype(attn_ref.dtype)


def self_attention(x, params, *, batch_block=None):
    """x: (B, S, E) float32. params: PyTorch-layout weights (out, in) and biases.

    batch_block: batches processed per grid step. None -> all batches in one step
    (best at small shapes); pick B // 2 (etc.) on v7x to keep both TensorCores busy.
    """
    B, S, E = x.shape
    BB = B if batch_block is None else batch_block
    assert B % BB == 0, "batch_block must divide the batch size"
    n_blocks = B // BB
    rows = BB * S

    # Fuse Q/K/V weights into a single (E, 3E) matrix (and (1, 3E) bias); pre-transpose
    # to (in, out) so the kernel computes y = x @ W + b directly on the MXU.
    w_qkv = jnp.concatenate([params["wq"].T, params["wk"].T, params["wv"].T], axis=1)
    b_qkv = jnp.concatenate([params["bq"], params["bk"], params["bv"]]).reshape(1, 3 * E)
    w_o = params["wo"].T
    b_o = params["bo"].reshape(1, E)

    # Batch folded into the M (sublane) dimension for all projections.
    x2d = x.reshape(B * S, E)

    # Advisory cost hint for XLA's scheduler.
    flops = 8 * B * S * E * E + 4 * B * S * S * E
    bytes_accessed = 4 * (2 * B * S * E + B * S * S + 4 * E * E + 4 * E)
    cost = pl.CostEstimate(flops=flops, transcendentals=B * S * S,
                           bytes_accessed=bytes_accessed)

    w_qkv_spec = pl.BlockSpec((E, 3 * E), lambda i: (0, 0))
    b_qkv_spec = pl.BlockSpec((1, 3 * E), lambda i: (0, 0))
    w_o_spec = pl.BlockSpec((E, E), lambda i: (0, 0))
    b_o_spec = pl.BlockSpec((1, E), lambda i: (0, 0))

    out2d, attn = pl.pallas_call(
        _self_attention_kernel,
        out_shape=(
            jax.ShapeDtypeStruct((B * S, E), jnp.float32),
            jax.ShapeDtypeStruct((B, S, S), jnp.float32),
        ),
        grid_spec=pltpu.PrefetchScalarGridSpec(
            num_scalar_prefetch=0,
            grid=(n_blocks,),
            in_specs=[
                pl.BlockSpec((rows, E), lambda i: (i, 0)),      # x rows for this block
                w_qkv_spec, b_qkv_spec,                         # fused QKV
                w_o_spec, b_o_spec,                             # output projection
            ],
            out_specs=[
                pl.BlockSpec((rows, E), lambda i: (i, 0)),      # output rows (2-D slab)
                pl.BlockSpec((BB, S, S), lambda i: (i, 0, 0)),  # attention weights
            ],
        ),
        compiler_params=pltpu.CompilerParams(
            dimension_semantics=("parallel",),
        ),
        cost_estimate=cost,
    )(x2d, w_qkv, b_qkv, w_o, b_o)

    return out2d.reshape(B, S, E), attn


def _reference(x, params):
    """Pure-JAX reference mirroring the PyTorch forward (eval mode)."""
    def linear(h, w, b):
        return jnp.einsum("bse,oe->bso", h, w) + b

    q = linear(x, params["wq"], params["bq"])
    k = linear(x, params["wk"], params["bk"])
    v = linear(x, params["wv"], params["bv"])
    scores = jnp.einsum("bqe,bke->bqk", q, k) / jnp.sqrt(jnp.float32(x.shape[-1]))
    attn = jax.nn.softmax(scores, axis=-1)
    ctx = jnp.einsum("bqk,bke->bqe", attn, v)
    out = linear(ctx, params["wo"], params["bo"])
    return out, attn


if __name__ == "__main__":
    B, S, E = 2, 8, 32

    key = jax.random.PRNGKey(0)
    keys = jax.random.split(key, 9)

    # Deterministic parameter init (PyTorch Linear weight layout: (out, in)).
    bound = 1.0 / jnp.sqrt(jnp.float32(E))
    params = {
        "wq": jax.random.uniform(keys[0], (E, E), jnp.float32, -bound, bound),
        "bq": jax.random.uniform(keys[1], (E,), jnp.float32, -bound, bound),
        "wk": jax.random.uniform(keys[2], (E, E), jnp.float32, -bound, bound),
        "bk": jax.random.uniform(keys[3], (E,), jnp.float32, -bound, bound),
        "wv": jax.random.uniform(keys[4], (E, E), jnp.float32, -bound, bound),
        "bv": jax.random.uniform(keys[5], (E,), jnp.float32, -bound, bound),
        "wo": jax.random.uniform(keys[6], (E, E), jnp.float32, -bound, bound),
        "bo": jax.random.uniform(keys[7], (E,), jnp.float32, -bound, bound),
    }
    x = jax.random.normal(keys[8], (B, S, E), jnp.float32)

    out, attn = self_attention(x, params)
    out = jax.block_until_ready(out)
    attn = jax.block_until_ready(attn)

    ref_out, ref_attn = _reference(x, params)
    # Tolerances account for the approximate (EUP) reciprocal in the softmax
    # normalization (~1e-6..1e-4 relative); all matmuls accumulate in f32.
    assert jnp.allclose(out, ref_out, atol=1e-3, rtol=1e-3), "output mismatch"
    assert jnp.allclose(attn, ref_attn, atol=1e-3, rtol=1e-3), "attn mismatch"

    print("KERNEL_OK")
</pallas_src>

<mosaic_0001>
module attributes {stable_mosaic.version = 11 : i64} {
  func.func @_self_attention_kernel(%arg0: i32, %arg1: memref<16x32xf32, #tpu.memory_space<vmem>>, %arg2: memref<32x96xf32, #tpu.memory_space<vmem>>, %arg3: memref<1x96xf32, #tpu.memory_space<vmem>>, %arg4: memref<32x32xf32, #tpu.memory_space<vmem>>, %arg5: memref<1x32xf32, #tpu.memory_space<vmem>>, %arg6: memref<16x32xf32, #tpu.memory_space<vmem>>, %arg7: memref<2x8x8xf32, #tpu.memory_space<vmem>>) attributes {dimension_semantics = [#tpu.dimension_semantics<parallel>], iteration_bounds = array<i64: 1>, scalar_prefetch = 0 : i64, scratch_operands = 0 : i64, tpu.core_type = #tpu.core_type<tc>, window_params = [{transform_indices = @transform_0, window_bounds = array<i64: 16, 32>}, {pipeline_mode = #tpu.pipeline_mode<synchronous>, transform_indices = @transform_1, window_bounds = array<i64: 32, 96>}, {pipeline_mode = #tpu.pipeline_mode<synchronous>, transform_indices = @transform_2, window_bounds = array<i64: 1, 96>}, {pipeline_mode = #tpu.pipeline_mode<synchronous>, transform_indices = @transform_3, window_bounds = array<i64: 32, 32>}, {pipeline_mode = #tpu.pipeline_mode<synchronous>, transform_indices = @transform_4, window_bounds = array<i64: 1, 32>}, {transform_indices = @transform_5, window_bounds = array<i64: 16, 32>}, {transform_indices = @transform_6, window_bounds = array<i64: 2, 8, 8>}]} {
    %c0 = arith.constant 0 : index
    %c0_0 = arith.constant 0 : index
    %0 = vector.load %arg1[%c0, %c0_0] : memref<16x32xf32, #tpu.memory_space<vmem>>, vector<16x32xf32>
    %c0_1 = arith.constant 0 : index
    %c0_2 = arith.constant 0 : index
    %1 = vector.load %arg2[%c0_1, %c0_2] : memref<32x96xf32, #tpu.memory_space<vmem>>, vector<32x96xf32>
    %cst = arith.constant dense<0.000000e+00> : vector<16x96xf32>
    %2 = tpu.matmul %0, %1, %cst {dimension_numbers = #tpu.dot_dimension_numbers<[1], [0], [0], [1], [0, 0, 1, 1], [], []>} : vector<16x32xf32>, vector<32x96xf32>, vector<16x96xf32> -> vector<16x96xf32>
    %c0_3 = arith.constant 0 : index
    %c0_4 = arith.constant 0 : index
    %3 = vector.load %arg3[%c0_3, %c0_4] : memref<1x96xf32, #tpu.memory_space<vmem>>, vector<1x96xf32>
    %4 = vector.broadcast %3 : vector<1x96xf32> to vector<16x96xf32>
    %5 = arith.addf %2, %4 : vector<16x96xf32>
    %6 = vector.extract_strided_slice %5 {offsets = [0, 0], sizes = [16, 32], strides = [1, 1]} : vector<16x96xf32> to vector<16x32xf32>
    %7 = vector.shape_cast %6 : vector<16x32xf32> to vector<2x8x32xf32>
    %8 = vector.extract_strided_slice %5 {offsets = [0, 32], sizes = [16, 32], strides = [1, 1]} : vector<16x96xf32> to vector<16x32xf32>
    %9 = vector.shape_cast %8 : vector<16x32xf32> to vector<2x8x32xf32>
    %10 = vector.extract_strided_slice %5 {offsets = [0, 64], sizes = [16, 32], strides = [1, 1]} : vector<16x96xf32> to vector<16x32xf32>
    %11 = vector.shape_cast %10 : vector<16x32xf32> to vector<2x8x32xf32>
    %cst_5 = arith.constant 3.200000e+01 : f32
    %12 = math.sqrt %cst_5 : f32
    %cst_6 = arith.constant 1.000000e+00 : f32
    %13 = arith.divf %cst_6, %12 : f32
    %cst_7 = arith.constant dense<0.000000e+00> : vector<2x8x8xf32>
    %14 = tpu.matmul %7, %9, %cst_7 {dimension_numbers = #tpu.dot_dimension_numbers<[2], [2], [1], [1], [0, 0, 0, 1, 1, 1], [0], [0]>} : vector<2x8x32xf32>, vector<2x8x32xf32>, vector<2x8x8xf32> -> vector<2x8x8xf32>
    %15 = vector.broadcast %13 : f32 to vector<2x8x8xf32>
    %16 = arith.mulf %14, %15 : vector<2x8x8xf32>
    %cst_8 = arith.constant dense<0xFF800000> : vector<2x8xf32>
    %17 = vector.multi_reduction <maximumf>, %16, %cst_8 [2] : vector<2x8x8xf32> to vector<2x8xf32>
    %18 = vector.shape_cast %17 : vector<2x8xf32> to vector<2x8x1xf32>
    %19 = vector.broadcast %18 : vector<2x8x1xf32> to vector<2x8x8xf32>
    %20 = arith.subf %16, %19 : vector<2x8x8xf32>
    %21 = math.exp %20 : vector<2x8x8xf32>
    %cst_9 = arith.constant dense<0.000000e+00> : vector<2x8xf32>
    %22 = vector.multi_reduction <add>, %21, %cst_9 [2] : vector<2x8x8xf32> to vector<2x8xf32>
    %23 = vector.shape_cast %22 : vector<2x8xf32> to vector<2x8x1xf32>
    %24 = tpu.reciprocal %23 {approx = true} : vector<2x8x1xf32> -> vector<2x8x1xf32>
    %25 = vector.broadcast %24 : vector<2x8x1xf32> to vector<2x8x8xf32>
    %26 = arith.mulf %21, %25 : vector<2x8x8xf32>
    %cst_10 = arith.constant dense<0.000000e+00> : vector<2x8x32xf32>
    %27 = tpu.matmul %26, %11, %cst_10 {dimension_numbers = #tpu.dot_dimension_numbers<[2], [1], [1], [2], [0, 0, 0, 1, 1, 2], [0], [0]>} : vector<2x8x8xf32>, vector<2x8x32xf32>, vector<2x8x32xf32> -> vector<2x8x32xf32>
    %28 = vector.shape_cast %27 : vector<2x8x32xf32> to vector<16x32xf32>
    %c0_11 = arith.constant 0 : index
    %c0_12 = arith.constant 0 : index
    %29 = vector.load %arg4[%c0_11, %c0_12] : memref<32x32xf32, #tpu.memory_space<vmem>>, vector<32x32xf32>
    %cst_13 = arith.constant dense<0.000000e+00> : vector<16x32xf32>
    %30 = tpu.matmul %28, %29, %cst_13 {dimension_numbers = #tpu.dot_dimension_numbers<[1], [0], [0], [1], [0, 0, 1, 1], [], []>} : vector<16x32xf32>, vector<32x32xf32>, vector<16x32xf32> -> vector<16x32xf32>
    %c0_14 = arith.constant 0 : index
    %c0_15 = arith.constant 0 : index
    %31 = vector.load %arg5[%c0_14, %c0_15] : memref<1x32xf32, #tpu.memory_space<vmem>>, vector<1x32xf32>
    %32 = vector.broadcast %31 : vector<1x32xf32> to vector<16x32xf32>
    %33 = arith.addf %30, %32 : vector<16x32xf32>
    %c0_16 = arith.constant 0 : index
    %c0_17 = arith.constant 0 : index
    %34 = vector.load %arg6[%c0_16, %c0_17] : memref<16x32xf32, #tpu.memory_space<vmem>>, vector<16x32xf32>
    tpu.vector_store %arg6[%c0_16, %c0_17], %33 {strides = array<i32>} : memref<16x32xf32, #tpu.memory_space<vmem>>, vector<16x32xf32>,
    %c0_18 = arith.constant 0 : index
    %c0_19 = arith.constant 0 : index
    %c0_20 = arith.constant 0 : index
    %35 = vector.load %arg7[%c0_18, %c0_19, %c0_20] : memref<2x8x8xf32, #tpu.memory_space<vmem>>, vector<2x8x8xf32>
    tpu.vector_store %arg7[%c0_18, %c0_19, %c0_20], %26 {strides = array<i32>} : memref<2x8x8xf32, #tpu.memory_space<vmem>>, vector<2x8x8xf32>,
    return
  }
  func.func @transform_0(%arg0: i32) -> (i32, i32) {
    %c0_i32 = arith.constant 0 : i32
    %c0_i32_0 = arith.constant 0 : i32
    return %arg0, %c0_i32 : i32, i32
  }
  func.func @transform_1(%arg0: i32) -> (i32, i32) {
    %c0_i32 = arith.constant 0 : i32
    %c0_i32_0 = arith.constant 0 : i32
    %c0_i32_1 = arith.constant 0 : i32
    return %c0_i32, %c0_i32_0 : i32, i32
  }
  func.func @transform_2(%arg0: i32) -> (i32, i32) {
    %c0_i32 = arith.constant 0 : i32
    %c0_i32_0 = arith.constant 0 : i32
    %c0_i32_1 = arith.constant 0 : i32
    return %c0_i32, %c0_i32_0 : i32, i32
  }
  func.func @transform_3(%arg0: i32) -> (i32, i32) {
    %c0_i32 = arith.constant 0 : i32
    %c0_i32_0 = arith.constant 0 : i32
    %c0_i32_1 = arith.constant 0 : i32
    return %c0_i32, %c0_i32_0 : i32, i32
  }
  func.func @transform_4(%arg0: i32) -> (i32, i32) {
    %c0_i32 = arith.constant 0 : i32
    %c0_i32_0 = arith.constant 0 : i32
    %c0_i32_1 = arith.constant 0 : i32
    return %c0_i32, %c0_i32_0 : i32, i32
  }
  func.func @transform_5(%arg0: i32) -> (i32, i32) {
    %c0_i32 = arith.constant 0 : i32
    %c0_i32_0 = arith.constant 0 : i32
    return %arg0, %c0_i32 : i32, i32
  }
  func.func @transform_6(%arg0: i32) -> (i32, i32, i32) {
    %c0_i32 = arith.constant 0 : i32
    %c0_i32_0 = arith.constant 0 : i32
    %c0_i32_1 = arith.constant 0 : i32
    return %arg0, %c0_i32, %c0_i32_0 : i32, i32, i32
  }
}

</mosaic_0001>

<llo_original>
// kernel: tpu_custom_call.1
$region0: #{tpu_custom_call.1}
  #allocation0 [shape = 'u32[]', space=smem, size = 0x4, offset = 0x4, fixed_abs, tag = 'smem constant byte address 0x4 - core index']
  #allocation1 [shape = 'u32[144,128]{1,0:T(1,128)}', space=vmem, size = 0x12000, scoped, tag = 'internal scratch']
  %s0 = inlined_call_operand.hbm [shape: f32[16,32], index: 0, kind: input, shape index: {}]
  %s1 = inlined_call_operand.hbm [shape: f32[32,96], index: 1, kind: input, shape index: {}]
  %s2 = inlined_call_operand.vmem [shape: f32[1,96], index: 2, kind: input, shape index: {}]
  %s3 = inlined_call_operand.hbm [shape: f32[32,32], index: 3, kind: input, shape index: {}]
  %s4 = inlined_call_operand.vmem [shape: f32[1,32], index: 4, kind: input, shape index: {}]
  %s5 = inlined_call_operand.hbm [shape: f32[16,32], index: 5, kind: output, shape index: {0}]
  %s6 = inlined_call_operand.hbm [shape: f32[2,8,8], index: 6, kind: output, shape index: {1}]
  %7 = xla_tuple %s5, %s6
  %s8 = sld [smem:[#allocation0]]
  $region50: #{tpu_custom_call.1} parent=0
    _
  %s10 = ssub.s32 1, %s8
  %s11 = scalar_select 0, %s10, %s8
  $region1: #{tpu_custom_call.1} parent=0
    #allocation2 [shape = 'u8[8192]{0}', space=vmem, size = 0x2000, scoped, tag = 'input window, operand 0, single buffered']
    #allocation3 [shape = 's32[1]{0}', space=sflag, size = 0x4, scoped, tag = 'scoped memory for tpu_custom_call.1']
    #allocation4 [shape = 's32[1]{0}', space=sflag, size = 0x4, scoped, tag = 'scoped memory for tpu_custom_call.1']
    #allocation5 [shape = 'u8[16384]{0}', space=vmem, size = 0x4000, scoped, tag = 'input window, operand 1, single buffered']
    #allocation6 [shape = 's32[1]{0}', space=sflag, size = 0x4, scoped, tag = 'scoped memory for tpu_custom_call.1']
    #allocation7 [shape = 'u8[16384]{0}', space=vmem, size = 0x4000, scoped, tag = 'input window, operand 3, single buffered']
    #allocation8 [shape = 'u8[8192]{0}', space=vmem, size = 0x2000, scoped, tag = 'output window, operand 0, single buffered']
    #allocation9 [shape = 'u8[8192]{0}', space=vmem, size = 0x2000, scoped, tag = 'output window, operand 1, single buffered']
    #allocation10 [shape = 's32[1]{0}', space=sflag, size = 0x4, scoped, tag = 'scoped memory for tpu_custom_call.1']
    %12 = vsyncpa [#allocation3], 0
    %13 = vsyncpa [#allocation6], 0
    %14 = vsyncpa [#allocation4], 0
    %15 = vsyncpa [#allocation10], 0
    // Predicated region
    $region2: #{tpu_custom_call.1} parent=1 // pred_check
      _
    $region3: #{tpu_custom_call.1} parent=1 // pred_check_branch
      %17 = sbr.rel (0) target = $region5
    $region4: #{tpu_custom_call.1} parent=1 // pred_region
      %s19 = ssub.s32 256, 256
      %20 = vsyncadd [#allocation3], %s19
      %s21 = sshll.u32 [#allocation2], 4
      %s22 = int_to_ptr.vmem [resolvable:$true] %s21
      %27 = dma.hbm_to_vmem [thread:$0]  %s0, 256, %s22, [#allocation3], 128, 128, 8
    $region5: #{tpu_custom_call.1} parent=1 // pred_fallthru
      _
    // Predicated region
    $region6: #{tpu_custom_call.1} parent=1 // pred_check
      _
    $region7: #{tpu_custom_call.1} parent=1 // pred_check_branch
      %29 = sbr.rel (0) target = $region9
    $region8: #{tpu_custom_call.1} parent=1 // pred_region
      %s31 = ssub.s32 512, 512
      %32 = vsyncadd [#allocation6], %s31
      %s33 = sshll.u32 [#allocation5], 4
      %s34 = int_to_ptr.vmem [resolvable:$true] %s33
      %39 = dma.hbm_to_vmem [thread:$0]  %s1, 512, %s34, [#allocation6], 128, 128, 8
    $region9: #{tpu_custom_call.1} parent=1 // pred_fallthru
      _
    // Predicated region
    $region10: #{tpu_custom_call.1} parent=1 // pred_check
      _
    $region11: #{tpu_custom_call.1} parent=1 // pred_check_branch
      %41 = sbr.rel (0) target = $region13
    $region12: #{tpu_custom_call.1} parent=1 // pred_region
      _
    $region13: #{tpu_custom_call.1} parent=1 // pred_fallthru
      _
    // Predicated region
    $region14: #{tpu_custom_call.1} parent=1 // pred_check
      _
    $region15: #{tpu_custom_call.1} parent=1 // pred_check_branch
      %43 = sbr.rel (0) target = $region17
    $region16: #{tpu_custom_call.1} parent=1 // pred_region
      %s45 = ssub.s32 512, 512
      %46 = vsyncadd [#allocation6], %s45
      %s47 = sshll.u32 [#allocation7], 4
      %s48 = int_to_ptr.vmem [resolvable:$true] %s47
      %53 = dma.hbm_to_vmem [thread:$0]  %s3, 512, %s48, [#allocation6], 128, 128, 8
    $region17: #{tpu_custom_call.1} parent=1 // pred_fallthru
      _
    // Predicated region
    $region18: #{tpu_custom_call.1} parent=1 // pred_check
      _
    $region19: #{tpu_custom_call.1} parent=1 // pred_check_branch
      %55 = sbr.rel (0) target = $region21
    $region20: #{tpu_custom_call.1} parent=1 // pred_region
      _
    $region21: #{tpu_custom_call.1} parent=1 // pred_fallthru
      _
    // Predicated region
    $region22: #{tpu_custom_call.1} parent=1 // pred_check
      _
    $region23: #{tpu_custom_call.1} parent=1 // pred_check_branch
      %57 = sbr.rel (0) target = $region25
    $region24: #{tpu_custom_call.1} parent=1 // pred_region
      %58 = dma.done [#allocation3], 256
    $region25: #{tpu_custom_call.1} parent=1 // pred_fallthru
      _
    // Predicated region
    $region26: #{tpu_custom_call.1} parent=1 // pred_check
      _
    $region27: #{tpu_custom_call.1} parent=1 // pred_check_branch
      %60 = sbr.rel (0) target = $region29
    $region28: #{tpu_custom_call.1} parent=1 // pred_region
      %61 = dma.done [#allocation6], 512
    $region29: #{tpu_custom_call.1} parent=1 // pred_fallthru
      _
    // Predicated region
    $region30: #{tpu_custom_call.1} parent=1 // pred_check
      _
    $region31: #{tpu_custom_call.1} parent=1 // pred_check_branch
      %63 = sbr.rel (0) target = $region33
    $region32: #{tpu_custom_call.1} parent=1 // pred_region
      %64 = dma.done [#allocation6], 512
    $region33: #{tpu_custom_call.1} parent=1 // pred_fallthru
      _
    %v65 = vld [vmem:[#allocation2] sm:$0xff]
    %v66 = vld [vmem:[#allocation2 + $0x8] sm:$0xff]
    %v67 = vld [vmem:[#allocation5] sm:$0xff]
    %v68 = vld [vmem:[#allocation5 + $0x8] sm:$0xff]
    %v69 = vld [vmem:[#allocation5 + $0x10] sm:$0xff]
    %v70 = vld [vmem:[#allocation5 + $0x18] sm:$0xff]
    %v71 = vld [vmem:[%s2] sm:$0x1]
    %v73 = vlaneseq
    %v74 = vshrl.u32 %v73, 7
    %v75 = vsub.s32 0, %v74
    %v76 = vrot.slane %v71, %v75
    %vm78 = vcmask 261120
    %v80 = vsel %vm78, %v65, 0
    %v83 = vsel %vm78, %v66, 0
    %85 = vmatprep.subr.mxu0 0.0
    %86 = vmatpush1.msra.mxu0 %v67
    %87 = vmatprep.subr.mxu0 0.0
    %88 = vmatpush1.msra.mxu0 %v68
    %89 = vmatprep.subr.mxu0 0.0
    %90 = vmatpush1.msra.mxu0 %v69
    %91 = vmatprep.subr.mxu0 0.0
    %92 = vmatpush1.msra.mxu0 %v70
    %93 = vmatprep.subr.mxu0 0.0
    %94 = vmatpush1.msra.mxu0 0.0
    %95 = vmatprep.subr.mxu0 0.0
    %96 = vmatpush1.msra.mxu0 0.0
    %97 = vmatprep.subr.mxu0 0.0
    %98 = vmatpush1.msra.mxu0 0.0
    %99 = vmatprep.subr.mxu0 0.0
    %100 = vmatpush1.msra.mxu0 0.0
    %101 = vmatprep.subr.mxu0 0.0
    %102 = vmatpush1.msra.mxu0 0.0
    %103 = vmatprep.subr.mxu0 0.0
    %104 = vmatpush1.msra.mxu0 0.0
    %105 = vmatprep.subr.mxu0 0.0
    %106 = vmatpush1.msra.mxu0 0.0
    %107 = vmatprep.subr.mxu0 0.0
    %108 = vmatpush1.msra.mxu0 0.0
    %109 = vmatprep.subr.mxu0 0.0
    %110 = vmatpush1.msra.mxu0 0.0
    %111 = vmatprep.subr.mxu0 0.0
    %112 = vmatpush1.msra.mxu0 0.0
    %113 = vmatprep.subr.mxu0 0.0
    %114 = vmatpush1.msra.mxu0 0.0
    %115 = vmatprep.subr.mxu0 0.0
    %116 = vmatpush1.msra.mxu0 0.0
    %117 = vmatprep.subr.mxu0 0.0
    %118 = vmatpush1.msra.mxu0 0.0
    %119 = vmatprep.subr.mxu0 0.0
    %120 = vmatpush1.msra.mxu0 0.0
    %121 = vmatprep.subr.mxu0 0.0
    %122 = vmatpush1.msra.mxu0 0.0
    %123 = vmatprep.subr.mxu0 0.0
    %124 = vmatpush1.msra.mxu0 0.0
    %125 = vmatprep.subr.mxu0 0.0
    %126 = vmatpush1.msra.mxu0 0.0
    %127 = vmatprep.subr.mxu0 0.0
    %128 = vmatpush1.msra.mxu0 0.0
    %129 = vmatprep.subr.mxu0 0.0
    %130 = vmatpush1.msra.mxu0 0.0
    %131 = vmatprep.subr.mxu0 0.0
    %132 = vmatpush1.msra.mxu0 0.0
    %133 = vmatprep.subr.mxu0 0.0
    %134 = vmatpush1.msra.mxu0 0.0
    %135 = vmatprep.subr.mxu0 0.0
    %136 = vmatpush1.msra.mxu0 0.0
    %137 = vmatprep.subr.mxu0 0.0
    %138 = vmatpush1.msra.mxu0 0.0
    %139 = vmatprep.subr.mxu0 0.0
    %140 = vmatpush1.msra.mxu0 0.0
    %141 = vmatprep.subr.mxu0 0.0
    %142 = vmatpush1.msra.mxu0 0.0
    %143 = vmatprep.subr.mxu0 0.0
    %144 = vmatpush1.msra.mxu0 0.0
    %145 = vmatprep.subr.mxu0 0.0
    %146 = vmatpush1.msra.mxu0 0.0
    %147 = vmatprep.subr.mxu0 0.0
    %148 = vmatpush1.msra.mxu0 0.0
    %149 = vmatprep.mubr.f32.mxu0 0.0
    %150 = vmatmul.mubr.f32.gmra.mrb[0].mxu0 %v80
    %v151 = vpop.f32.mrb[0].mxu0
    %v152 = vadd.f32 %v76, %v151
    %v153 = vpop.f32.mrb[0].mxu0
    %154 = vmatprep.mubr.f32.mxu0 0.0
    %155 = vmatmul.mubr.f32.gmra.mrb[0].mxu0 %v83
    %v156 = vpop.f32.mrb[0].mxu0
    %v157 = vadd.f32 %v76, %v156
    %v158 = vpop.f32.mrb[0].mxu0
    %159 = vdwg.mxu0
    %161 = vrot.lane.b32.xlu0 %v152, 96
    %v162 = vpop.permute.xlu0 %161
    %v163 = vsel %vm78, %v152, 0
    %v165 = vsel %vm78, %v162, 0
    %167 = vmatprep.subr.mxu0 0.0
    %168 = vmatpush1.xpose.msra.mxu0 %v165
    %169 = vmatprep.subr.mxu0 0.0
    %170 = vmatpush1.xpose.msra.mxu0 0.0
    %171 = vmatprep.subr.mxu0 0.0
    %172 = vmatpush1.xpose.msra.mxu0 0.0
    %173 = vmatprep.subr.mxu0 0.0
    %174 = vmatpush1.xpose.msra.mxu0 0.0
    %175 = vmatprep.subr.mxu0 0.0
    %176 = vmatpush1.xpose.msra.mxu0 0.0
    %177 = vmatprep.subr.mxu0 0.0
    %178 = vmatpush1.xpose.msra.mxu0 0.0
    %179 = vmatprep.subr.mxu0 0.0
    %180 = vmatpush1.xpose.msra.mxu0 0.0
    %181 = vmatprep.subr.mxu0 0.0
    %182 = vmatpush1.xpose.msra.mxu0 0.0
    %183 = vmatprep.subr.mxu0 0.0
    %184 = vmatpush1.xpose.msra.mxu0 0.0
    %185 = vmatprep.subr.mxu0 0.0
    %186 = vmatpush1.xpose.msra.mxu0 0.0
    %187 = vmatprep.subr.mxu0 0.0
    %188 = vmatpush1.xpose.msra.mxu0 0.0
    %189 = vmatprep.subr.mxu0 0.0
    %190 = vmatpush1.xpose.msra.mxu0 0.0
    %191 = vmatprep.subr.mxu0 0.0
    %192 = vmatpush1.xpose.msra.mxu0 0.0
    %193 = vmatprep.subr.mxu0 0.0
    %194 = vmatpush1.xpose.msra.mxu0 0.0
    %195 = vmatprep.subr.mxu0 0.0
    %196 = vmatpush1.xpose.msra.mxu0 0.0
    %197 = vmatprep.subr.mxu0 0.0
    %198 = vmatpush1.xpose.msra.mxu0 0.0
    %199 = vmatprep.subr.mxu0 0.0
    %200 = vmatpush1.xpose.msra.mxu0 0.0
    %201 = vmatprep.subr.mxu0 0.0
    %202 = vmatpush1.xpose.msra.mxu0 0.0
    %203 = vmatprep.subr.mxu0 0.0
    %204 = vmatpush1.xpose.msra.mxu0 0.0
    %205 = vmatprep.subr.mxu0 0.0
    %206 = vmatpush1.xpose.msra.mxu0 0.0
    %207 = vmatprep.subr.mxu0 0.0
    %208 = vmatpush1.xpose.msra.mxu0 0.0
    %209 = vmatprep.subr.mxu0 0.0
    %210 = vmatpush1.xpose.msra.mxu0 0.0
    %211 = vmatprep.subr.mxu0 0.0
    %212 = vmatpush1.xpose.msra.mxu0 0.0
    %213 = vmatprep.subr.mxu0 0.0
    %214 = vmatpush1.xpose.msra.mxu0 0.0
    %215 = vmatprep.subr.mxu0 0.0
    %216 = vmatpush1.xpose.msra.mxu0 0.0
    %217 = vmatprep.subr.mxu0 0.0
    %218 = vmatpush1.xpose.msra.mxu0 0.0
    %219 = vmatprep.subr.mxu0 0.0
    %220 = vmatpush1.xpose.msra.mxu0 0.0
    %221 = vmatprep.subr.mxu0 0.0
    %222 = vmatpush1.xpose.msra.mxu0 0.0
    %223 = vmatprep.subr.mxu0 0.0
    %224 = vmatpush1.xpose.msra.mxu0 0.0
    %225 = vmatprep.subr.mxu0 0.0
    %226 = vmatpush1.xpose.msra.mxu0 0.0
    %227 = vmatprep.subr.mxu0 0.0
    %228 = vmatpush1.xpose.msra.mxu0 0.0
    %229 = vmatprep.subr.mxu0 0.0
    %230 = vmatpush1.xpose.msra.mxu0 0.0
    %231 = vmatprep.mubr.f32.mxu0 0.0
    %232 = vmatmul.mubr.f32.gmra.mrb[0].mxu0 %v163
    %v233 = vpop.f32.mrb[0].mxu0
    %v234 = vadd.f32 0.0, %v233
    %v235 = vpop.f32.mrb[0].mxu0
    %236 = vdwg.mxu0
    %238 = vrot.lane.b32.xlu0 %v157, 96
    %v239 = vpop.permute.xlu0 %238
    %v240 = vsel %vm78, %v157, 0
    %v242 = vsel %vm78, %v239, 0
    %244 = vmatprep.subr.mxu0 0.0
    %245 = vmatpush1.xpose.msra.mxu0 %v242
    %246 = vmatprep.subr.mxu0 0.0
    %247 = vmatpush1.xpose.msra.mxu0 0.0
    %248 = vmatprep.subr.mxu0 0.0
    %249 = vmatpush1.xpose.msra.mxu0 0.0
    %250 = vmatprep.subr.mxu0 0.0
    %251 = vmatpush1.xpose.msra.mxu0 0.0
    %252 = vmatprep.subr.mxu0 0.0
    %253 = vmatpush1.xpose.msra.mxu0 0.0
    %254 = vmatprep.subr.mxu0 0.0
    %255 = vmatpush1.xpose.msra.mxu0 0.0
    %256 = vmatprep.subr.mxu0 0.0
    %257 = vmatpush1.xpose.msra.mxu0 0.0
    %258 = vmatprep.subr.mxu0 0.0
    %259 = vmatpush1.xpose.msra.mxu0 0.0
    %260 = vmatprep.subr.mxu0 0.0
    %261 = vmatpush1.xpose.msra.mxu0 0.0
    %262 = vmatprep.subr.mxu0 0.0
    %263 = vmatpush1.xpose.msra.mxu0 0.0
    %264 = vmatprep.subr.mxu0 0.0
    %265 = vmatpush1.xpose.msra.mxu0 0.0
    %266 = vmatprep.subr.mxu0 0.0
    %267 = vmatpush1.xpose.msra.mxu0 0.0
    %268 = vmatprep.subr.mxu0 0.0
    %269 = vmatpush1.xpose.msra.mxu0 0.0
    %270 = vmatprep.subr.mxu0 0.0
    %271 = vmatpush1.xpose.msra.mxu0 0.0
    %272 = vmatprep.subr.mxu0 0.0
    %273 = vmatpush1.xpose.msra.mxu0 0.0
    %274 = vmatprep.subr.mxu0 0.0
    %275 = vmatpush1.xpose.msra.mxu0 0.0
    %276 = vmatprep.subr.mxu0 0.0
    %277 = vmatpush1.xpose.msra.mxu0 0.0
    %278 = vmatprep.subr.mxu0 0.0
    %279 = vmatpush1.xpose.msra.mxu0 0.0
    %280 = vmatprep.subr.mxu0 0.0
    %281 = vmatpush1.xpose.msra.mxu0 0.0
    %282 = vmatprep.subr.mxu0 0.0
    %283 = vmatpush1.xpose.msra.mxu0 0.0
    %284 = vmatprep.subr.mxu0 0.0
    %285 = vmatpush1.xpose.msra.mxu0 0.0
    %286 = vmatprep.subr.mxu0 0.0
    %287 = vmatpush1.xpose.msra.mxu0 0.0
    %288 = vmatprep.subr.mxu0 0.0
    %289 = vmatpush1.xpose.msra.mxu0 0.0
    %290 = vmatprep.subr.mxu0 0.0
    %291 = vmatpush1.xpose.msra.mxu0 0.0
    %292 = vmatprep.subr.mxu0 0.0
    %293 = vmatpush1.xpose.msra.mxu0 0.0
    %294 = vmatprep.subr.mxu0 0.0
    %295 = vmatpush1.xpose.msra.mxu0 0.0
    %296 = vmatprep.subr.mxu0 0.0
    %297 = vmatpush1.xpose.msra.mxu0 0.0
    %298 = vmatprep.subr.mxu0 0.0
    %299 = vmatpush1.xpose.msra.mxu0 0.0
    %300 = vmatprep.subr.mxu0 0.0
    %301 = vmatpush1.xpose.msra.mxu0 0.0
    %302 = vmatprep.subr.mxu0 0.0
    %303 = vmatpush1.xpose.msra.mxu0 0.0
    %304 = vmatprep.subr.mxu0 0.0
    %305 = vmatpush1.xpose.msra.mxu0 0.0
    %306 = vmatprep.subr.mxu0 0.0
    %307 = vmatpush1.xpose.msra.mxu0 0.0
    %308 = vmatprep.mubr.f32.mxu0 0.0
    %309 = vmatmul.mubr.f32.gmra.mrb[0].mxu0 %v240
    %v310 = vpop.f32.mrb[0].mxu0
    %v311 = vadd.f32 0.0, %v310
    %v312 = vpop.f32.mrb[0].mxu0
    %313 = vdwg.mxu0
    %v314 = vmul.f32 %v234, 0.17677669
    %v315 = vmul.f32 %v311, 0.17677669
    %vm316 = vcmask 64512
    %v317 = vsel %vm316, %v314, -inf
    %318 = vmax.xlane.f32.xlu0 %v317
    %v319 = vpop.xlane.xlu0 %318
    %v320 = vsel %vm316, %v315, -inf
    %321 = vmax.xlane.f32.xlu0 %v320
    %v322 = vpop.xlane.xlu0 %321
    %v323 = vsub.f32 %v314, %v319
    %v324 = vsub.f32 %v315, %v322
    %v325 = vmul.f32 %v323, 1.442695
    %v326 = vpow.pop %v325
    %v327 = vmul.f32 %v324, 1.442695
    %v328 = vpow.pop %v327
    %v329 = vsel %vm316, %v326, 0.0
    %330 = vadd.xlane.f32.xlu0 %v329
    %v331 = vpop.xlane.xlu0 %330
    %v332 = vsel %vm316, %v328, 0.0
    %333 = vadd.xlane.f32.xlu0 %v332
    %v334 = vpop.xlane.xlu0 %333
    %v335 = vrcp.pop %v331
    %v336 = vrcp.pop %v334
    %v337 = vmul.f32 %v326, %v335
    %v338 = vmul.f32 %v328, %v336
    %339 = vrot.lane.b32.xlu0 %v152, 64
    %v340 = vpop.permute.xlu0 %339
    %v343 = vsel %vm316, %v337, 0
    %345 = vmatprep.subr.mxu0 0.0
    %346 = vmatpush1.msra.mxu0 %v340
    %347 = vmatprep.subr.mxu0 0.0
    %348 = vmatpush1.msra.mxu0 0.0
    %349 = vmatprep.subr.mxu0 0.0
    %350 = vmatpush1.msra.mxu0 0.0
    %351 = vmatprep.subr.mxu0 0.0
    %352 = vmatpush1.msra.mxu0 0.0
    %353 = vmatprep.subr.mxu0 0.0
    %354 = vmatpush1.msra.mxu0 0.0
    %355 = vmatprep.subr.mxu0 0.0
    %356 = vmatpush1.msra.mxu0 0.0
    %357 = vmatprep.subr.mxu0 0.0
    %358 = vmatpush1.msra.mxu0 0.0
    %359 = vmatprep.subr.mxu0 0.0
    %360 = vmatpush1.msra.mxu0 0.0
    %361 = vmatprep.subr.mxu0 0.0
    %362 = vmatpush1.msra.mxu0 0.0
    %363 = vmatprep.subr.mxu0 0.0
    %364 = vmatpush1.msra.mxu0 0.0
    %365 = vmatprep.subr.mxu0 0.0
    %366 = vmatpush1.msra.mxu0 0.0
    %367 = vmatprep.subr.mxu0 0.0
    %368 = vmatpush1.msra.mxu0 0.0
    %369 = vmatprep.subr.mxu0 0.0
    %370 = vmatpush1.msra.mxu0 0.0
    %371 = vmatprep.subr.mxu0 0.0
    %372 = vmatpush1.msra.mxu0 0.0
    %373 = vmatprep.subr.mxu0 0.0
    %374 = vmatpush1.msra.mxu0 0.0
    %375 = vmatprep.subr.mxu0 0.0
    %376 = vmatpush1.msra.mxu0 0.0
    %377 = vmatprep.subr.mxu0 0.0
    %378 = vmatpush1.msra.mxu0 0.0
    %379 = vmatprep.subr.mxu0 0.0
    %380 = vmatpush1.msra.mxu0 0.0
    %381 = vmatprep.subr.mxu0 0.0
    %382 = vmatpush1.msra.mxu0 0.0
    %383 = vmatprep.subr.mxu0 0.0
    %384 = vmatpush1.msra.mxu0 0.0
    %385 = vmatprep.subr.mxu0 0.0
    %386 = vmatpush1.msra.mxu0 0.0
    %387 = vmatprep.subr.mxu0 0.0
    %388 = vmatpush1.msra.mxu0 0.0
    %389 = vmatprep.subr.mxu0 0.0
    %390 = vmatpush1.msra.mxu0 0.0
    %391 = vmatprep.subr.mxu0 0.0
    %392 = vmatpush1.msra.mxu0 0.0
    %393 = vmatprep.subr.mxu0 0.0
    %394 = vmatpush1.msra.mxu0 0.0
    %395 = vmatprep.subr.mxu0 0.0
    %396 = vmatpush1.msra.mxu0 0.0
    %397 = vmatprep.subr.mxu0 0.0
    %398 = vmatpush1.msra.mxu0 0.0
    %399 = vmatprep.subr.mxu0 0.0
    %400 = vmatpush1.msra.mxu0 0.0
    %401 = vmatprep.subr.mxu0 0.0
    %402 = vmatpush1.msra.mxu0 0.0
    %403 = vmatprep.subr.mxu0 0.0
    %404 = vmatpush1.msra.mxu0 0.0
    %405 = vmatprep.subr.mxu0 0.0
    %406 = vmatpush1.msra.mxu0 0.0
    %407 = vmatprep.subr.mxu0 0.0
    %408 = vmatpush1.msra.mxu0 0.0
    %409 = vmatprep.mubr.f32.mxu0 0.0
    %410 = vmatmul.mubr.f32.gmra.mrb[0].mxu0 %v343
    %v411 = vpop.f32.mrb[0].mxu0
    %v412 = vadd.f32 0.0, %v411
    %v413 = vpop.f32.mrb[0].mxu0
    %414 = vdwg.mxu0
    %415 = vrot.lane.b32.xlu0 %v157, 64
    %v416 = vpop.permute.xlu0 %415
    %v419 = vsel %vm316, %v338, 0
    %421 = vmatprep.subr.mxu0 0.0
    %422 = vmatpush1.msra.mxu0 %v416
    %423 = vmatprep.subr.mxu0 0.0
    %424 = vmatpush1.msra.mxu0 0.0
    %425 = vmatprep.subr.mxu0 0.0
    %426 = vmatpush1.msra.mxu0 0.0
    %427 = vmatprep.subr.mxu0 0.0
    %428 = vmatpush1.msra.mxu0 0.0
    %429 = vmatprep.subr.mxu0 0.0
    %430 = vmatpush1.msra.mxu0 0.0
    %431 = vmatprep.subr.mxu0 0.0
    %432 = vmatpush1.msra.mxu0 0.0
    %433 = vmatprep.subr.mxu0 0.0
    %434 = vmatpush1.msra.mxu0 0.0
    %435 = vmatprep.subr.mxu0 0.0
    %436 = vmatpush1.msra.mxu0 0.0
    %437 = vmatprep.subr.mxu0 0.0
    %438 = vmatpush1.msra.mxu0 0.0
    %439 = vmatprep.subr.mxu0 0.0
    %440 = vmatpush1.msra.mxu0 0.0
    %441 = vmatprep.subr.mxu0 0.0
    %442 = vmatpush1.msra.mxu0 0.0
    %443 = vmatprep.subr.mxu0 0.0
    %444 = vmatpush1.msra.mxu0 0.0
    %445 = vmatprep.subr.mxu0 0.0
    %446 = vmatpush1.msra.mxu0 0.0
    %447 = vmatprep.subr.mxu0 0.0
    %448 = vmatpush1.msra.mxu0 0.0
    %449 = vmatprep.subr.mxu0 0.0
    %450 = vmatpush1.msra.mxu0 0.0
    %451 = vmatprep.subr.mxu0 0.0
    %452 = vmatpush1.msra.mxu0 0.0
    %453 = vmatprep.subr.mxu0 0.0
    %454 = vmatpush1.msra.mxu0 0.0
    %455 = vmatprep.subr.mxu0 0.0
    %456 = vmatpush1.msra.mxu0 0.0
    %457 = vmatprep.subr.mxu0 0.0
    %458 = vmatpush1.msra.mxu0 0.0
    %459 = vmatprep.subr.mxu0 0.0
    %460 = vmatpush1.msra.mxu0 0.0
    %461 = vmatprep.subr.mxu0 0.0
    %462 = vmatpush1.msra.mxu0 0.0
    %463 = vmatprep.subr.mxu0 0.0
    %464 = vmatpush1.msra.mxu0 0.0
    %465 = vmatprep.subr.mxu0 0.0
    %466 = vmatpush1.msra.mxu0 0.0
    %467 = vmatprep.subr.mxu0 0.0
    %468 = vmatpush1.msra.mxu0 0.0
    %469 = vmatprep.subr.mxu0 0.0
    %470 = vmatpush1.msra.mxu0 0.0
    %471 = vmatprep.subr.mxu0 0.0
    %472 = vmatpush1.msra.mxu0 0.0
    %473 = vmatprep.subr.mxu0 0.0
    %474 = vmatpush1.msra.mxu0 0.0
    %475 = vmatprep.subr.mxu0 0.0
    %476 = vmatpush1.msra.mxu0 0.0
    %477 = vmatprep.subr.mxu0 0.0
    %478 = vmatpush1.msra.mxu0 0.0
    %479 = vmatprep.subr.mxu0 0.0
    %480 = vmatpush1.msra.mxu0 0.0
    %481 = vmatprep.subr.mxu0 0.0
    %482 = vmatpush1.msra.mxu0 0.0
    %483 = vmatprep.subr.mxu0 0.0
    %484 = vmatpush1.msra.mxu0 0.0
    %485 = vmatprep.mubr.f32.mxu0 0.0
    %486 = vmatmul.mubr.f32.gmra.mrb[0].mxu0 %v419
    %v487 = vpop.f32.mrb[0].mxu0
    %v488 = vadd.f32 0.0, %v487
    %v489 = vpop.f32.mrb[0].mxu0
    %490 = vdwg.mxu0
    %v491 = vld [vmem:[#allocation7] sm:$0xff]
    %v492 = vld [vmem:[#allocation7 + $0x8] sm:$0xff]
    %v493 = vld [vmem:[#allocation7 + $0x10] sm:$0xff]
    %v494 = vld [vmem:[#allocation7 + $0x18] sm:$0xff]
    %v495 = vld [vmem:[%s4] sm:$0x1]
    %v497 = vlaneseq
    %v498 = vshrl.u32 %v497, 7
    %v499 = vsub.s32 0, %v498
    %v500 = vrot.slane %v495, %v499
    %v503 = vsel %vm78, %v412, 0
    %v506 = vsel %vm78, %v488, 0
    %508 = vmatprep.subr.mxu0 0.0
    %509 = vmatpush1.msra.mxu0 %v491
    %510 = vmatprep.subr.mxu0 0.0
    %511 = vmatpush1.msra.mxu0 %v492
    %512 = vmatprep.subr.mxu0 0.0
    %513 = vmatpush1.msra.mxu0 %v493
    %514 = vmatprep.subr.mxu0 0.0
    %515 = vmatpush1.msra.mxu0 %v494
    %516 = vmatprep.subr.mxu0 0.0
    %517 = vmatpush1.msra.mxu0 0.0
    %518 = vmatprep.subr.mxu0 0.0
    %519 = vmatpush1.msra.mxu0 0.0
    %520 = vmatprep.subr.mxu0 0.0
    %521 = vmatpush1.msra.mxu0 0.0
    %522 = vmatprep.subr.mxu0 0.0
    %523 = vmatpush1.msra.mxu0 0.0
    %524 = vmatprep.subr.mxu0 0.0
    %525 = vmatpush1.msra.mxu0 0.0
    %526 = vmatprep.subr.mxu0 0.0
    %527 = vmatpush1.msra.mxu0 0.0
    %528 = vmatprep.subr.mxu0 0.0
    %529 = vmatpush1.msra.mxu0 0.0
    %530 = vmatprep.subr.mxu0 0.0
    %531 = vmatpush1.msra.mxu0 0.0
    %532 = vmatprep.subr.mxu0 0.0
    %533 = vmatpush1.msra.mxu0 0.0
    %534 = vmatprep.subr.mxu0 0.0
    %535 = vmatpush1.msra.mxu0 0.0
    %536 = vmatprep.subr.mxu0 0.0
    %537 = vmatpush1.msra.mxu0 0.0
    %538 = vmatprep.subr.mxu0 0.0
    %539 = vmatpush1.msra.mxu0 0.0
    %540 = vmatprep.subr.mxu0 0.0
    %541 = vmatpush1.msra.mxu0 0.0
    %542 = vmatprep.subr.mxu0 0.0
    %543 = vmatpush1.msra.mxu0 0.0
    %544 = vmatprep.subr.mxu0 0.0
    %545 = vmatpush1.msra.mxu0 0.0
    %546 = vmatprep.subr.mxu0 0.0
    %547 = vmatpush1.msra.mxu0 0.0
    %548 = vmatprep.subr.mxu0 0.0
    %549 = vmatpush1.msra.mxu0 0.0
    %550 = vmatprep.subr.mxu0 0.0
    %551 = vmatpush1.msra.mxu0 0.0
    %552 = vmatprep.subr.mxu0 0.0
    %553 = vmatpush1.msra.mxu0 0.0
    %554 = vmatprep.subr.mxu0 0.0
    %555 = vmatpush1.msra.mxu0 0.0
    %556 = vmatprep.subr.mxu0 0.0
    %557 = vmatpush1.msra.mxu0 0.0
    %558 = vmatprep.subr.mxu0 0.0
    %559 = vmatpush1.msra.mxu0 0.0
    %560 = vmatprep.subr.mxu0 0.0
    %561 = vmatpush1.msra.mxu0 0.0
    %562 = vmatprep.subr.mxu0 0.0
    %563 = vmatpush1.msra.mxu0 0.0
    %564 = vmatprep.subr.mxu0 0.0
    %565 = vmatpush1.msra.mxu0 0.0
    %566 = vmatprep.subr.mxu0 0.0
    %567 = vmatpush1.msra.mxu0 0.0
    %568 = vmatprep.subr.mxu0 0.0
    %569 = vmatpush1.msra.mxu0 0.0
    %570 = vmatprep.subr.mxu0 0.0
    %571 = vmatpush1.msra.mxu0 0.0
    %572 = vmatprep.mubr.f32.mxu0 0.0
    %573 = vmatmul.mubr.f32.gmra.mrb[0].mxu0 %v503
    %v574 = vpop.f32.mrb[0].mxu0
    %v575 = vadd.f32 %v500, %v574
    %v576 = vpop.f32.mrb[0].mxu0
    %577 = vmatprep.mubr.f32.mxu0 0.0
    %578 = vmatmul.mubr.f32.gmra.mrb[0].mxu0 %v506
    %v579 = vpop.f32.mrb[0].mxu0
    %v580 = vadd.f32 %v500, %v579
    %v581 = vpop.f32.mrb[0].mxu0
    %582 = vdwg.mxu0
    %583 = vst.msk [vmem:[#allocation8] sm:$0xff] %vm78, %v575
    %584 = vst.msk [vmem:[#allocation8 + $0x8] sm:$0xff] %vm78, %v580
    %585 = vst.msk [vmem:[#allocation9] sm:$0xff] %vm316, %v337
    %586 = vst.msk [vmem:[#allocation9 + $0x8] sm:$0xff] %vm316, %v338
    // Predicated region
    $region34: #{tpu_custom_call.1} parent=1 // pred_check
      _
    $region35: #{tpu_custom_call.1} parent=1 // pred_check_branch
      %588 = sbr.rel (0) target = $region37
    $region36: #{tpu_custom_call.1} parent=1 // pred_region
      %s590 = ssub.s32 256, 256
      %591 = vsyncadd [#allocation4], %s590
      %s592 = sshll.u32 [#allocation8], 4
      %s593 = int_to_ptr.vmem [resolvable:$true] %s592
      %598 = dma.vmem_to_hbm [thread:$0]  %s593, 256, %s5, [#allocation4], 128, 128, 8
    $region37: #{tpu_custom_call.1} parent=1 // pred_fallthru
      _
    // Predicated region
    $region38: #{tpu_custom_call.1} parent=1 // pred_check
      _
    $region39: #{tpu_custom_call.1} parent=1 // pred_check_branch
      %600 = sbr.rel (0) target = $region41
    $region40: #{tpu_custom_call.1} parent=1 // pred_region
      %s602 = ssub.s32 256, 256
      %603 = vsyncadd [#allocation10], %s602
      %s604 = sshll.u32 [#allocation9], 4
      %s605 = int_to_ptr.vmem [resolvable:$true] %s604
      %610 = dma.vmem_to_hbm [thread:$0]  %s605, 256, %s6, [#allocation10], 128, 128, 8
    $region41: #{tpu_custom_call.1} parent=1 // pred_fallthru
      _
    // Predicated region
    $region42: #{tpu_custom_call.1} parent=1 // pred_check
      _
    $region43: #{tpu_custom_call.1} parent=1 // pred_check_branch
      %612 = sbr.rel (0) target = $region45
    $region44: #{tpu_custom_call.1} parent=1 // pred_region
      %613 = dma.done [#allocation4], 256
    $region45: #{tpu_custom_call.1} parent=1 // pred_fallthru
      _
    // Predicated region
    $region46: #{tpu_custom_call.1} parent=1 // pred_check
      _
    $region47: #{tpu_custom_call.1} parent=1 // pred_check_branch
      %615 = sbr.rel (0) target = $region49
    $region48: #{tpu_custom_call.1} parent=1 // pred_region
      %616 = dma.done [#allocation10], 256
    $region49: #{tpu_custom_call.1} parent=1 // pred_fallthru
      _
    %617 = vsyncpa [#allocation3], 1
    %618 = vsyncpa [#allocation6], 1
    %619 = vsyncpa [#allocation4], 1
    %620 = vsyncpa [#allocation10], 1

</llo_original>
